<compile_context>
chip_gen: v6e
topology: v6e:2x2x1
jax: 0.10.0
libtpu: 0.0.40
codegen_flags: <defaults>
</compile_context>

<pallas_src>
import functools

import jax
import jax.numpy as jnp
from jax.experimental import pallas as pl
from jax.experimental.pallas import tpu as pltpu


def _round_up(x, m):
    return (x + m - 1) // m * m


def grn_kernel(x_ref, ctx_ref, w_in_ref, b_in_ref, w_fc2_ref, b_fc2_ref,
               w_glu_a_ref, b_glu_a_ref, w_glu_b_ref, b_glu_b_ref,
               gamma_ref, beta_ref, o_ref, *, out_dim):
    x = x_ref[...].astype(jnp.float32)

    # input_proj : (rows, in_dim) @ (in_dim, Hp) + b
    h = jnp.dot(x, w_in_ref[...], preferred_element_type=jnp.float32) + b_in_ref[...]
    residual = h

    # context projection: precomputed per batch in the wrapper, (1, Hp) broadcast
    h = h + ctx_ref[...]

    # ELU (alpha=1); clamp exp argument so the discarded branch never produces inf
    h = jnp.where(h > 0, h, jnp.exp(jnp.minimum(h, 0.0)) - 1.0)

    # fully_connected2
    h = jnp.dot(h, w_fc2_ref[...], preferred_element_type=jnp.float32) + b_fc2_ref[...]

    # GLU with pre-split weight halves (lane-aligned, no mid-vreg slicing)
    ga = jnp.dot(h, w_glu_a_ref[...], preferred_element_type=jnp.float32) + b_glu_a_ref[...]
    gb = jnp.dot(h, w_glu_b_ref[...], preferred_element_type=jnp.float32) + b_glu_b_ref[...]
    glu = ga * jax.nn.sigmoid(gb)

    # AddNorm: LayerNorm(glu + residual) over the REAL (unpadded) feature width.
    # Padded lanes of both glu and residual are exactly 0 by construction, so the
    # row sum equals the sum over real lanes; variance uses a lane mask.
    y = glu + residual
    hp = y.shape[-1]
    lane = jax.lax.broadcasted_iota(jnp.int32, (1, hp), 1)
    mask = lane < out_dim
    inv_n = 1.0 / out_dim
    mean = jnp.sum(y, axis=-1, keepdims=True) * inv_n
    centered = jnp.where(mask, y - mean, 0.0)
    var = jnp.sum(centered * centered, axis=-1, keepdims=True) * inv_n
    yn = centered * jax.lax.rsqrt(var + 1e-5)

    o_ref[...] = (yn * gamma_ref[...] + beta_ref[...]).astype(o_ref.dtype)


@functools.partial(jax.jit, static_argnames=("tile_rows",))
def grn_forward(a, context, params, tile_rows=256):
    B, S, in_dim = a.shape
    H = params["w_in"].shape[1]
    out_dim = params["w_glu"].shape[1] // 2
    # AddNorm(hidden_size) adds the GLU output to the hidden-width residual,
    # so the module itself requires output_size == hidden_size. Fail loudly.
    assert H == out_dim, "GatedResidualNetwork requires output_size == hidden_size"

    Hp = _round_up(H, 128)                       # lane-dense feature width
    ts = min(_round_up(tile_rows, 8), _round_up(S, 8))   # row tile (multiple of 8)
    S_pad = _round_up(S, ts)

    x = a if S_pad == S else jnp.pad(a, ((0, 0), (0, S_pad - S), (0, 0)))

    def padc(w):   # pad columns to Hp
        return jnp.pad(w, ((0, 0), (0, Hp - w.shape[1])))

    def padrc(w):  # pad rows and columns to (Hp, Hp)
        return jnp.pad(w, ((0, Hp - w.shape[0]), (0, Hp - w.shape[1])))

    def padv(v):   # 1-D vector -> (1, Hp)
        return jnp.pad(v, (0, Hp - v.shape[0]))[None, :]

    w_in = padc(params["w_in"])                              # (in_dim, Hp)
    b_in = padv(params["b_in"])
    w_fc2 = padrc(params["w_fc2"])                           # (Hp, Hp)
    b_fc2 = padv(params["b_fc2"])
    w_glu_a = padrc(params["w_glu"][:, :out_dim])            # (Hp, Hp)
    w_glu_b = padrc(params["w_glu"][:, out_dim:])
    b_glu_a = padv(params["b_glu"][:out_dim])
    b_glu_b = padv(params["b_glu"][out_dim:])
    gamma = padv(params["gamma"])
    beta = padv(params["beta"])

    # Tiny (B, ctx) @ (ctx, H) matmul done ONCE here instead of S times per batch
    # inside the kernel; reshaped (B, 1, Hp) so the kernel indexes it per batch.
    ctx_proj = (context.astype(jnp.float32) @ params["w_ctx"])
    ctx_proj = jnp.pad(ctx_proj, ((0, 0), (0, Hp - H)))[:, None, :]

    grid = (B, S_pad // ts)

    def full2(arr):
        return pl.BlockSpec(arr.shape, lambda b, s: (0, 0))

    in_specs = [
        pl.BlockSpec((None, ts, in_dim), lambda b, s: (b, s, 0)),   # x rows
        pl.BlockSpec((None, 1, Hp), lambda b, s: (b, 0, 0)),        # ctx_proj row (per batch)
        full2(w_in), full2(b_in),
        full2(w_fc2), full2(b_fc2),
        full2(w_glu_a), full2(b_glu_a),
        full2(w_glu_b), full2(b_glu_b),
        full2(gamma), full2(beta),
    ]
    out_specs = pl.BlockSpec((None, ts, Hp), lambda b, s: (b, s, 0))

    # Explicit VMEM budget (weights resident + double-buffered activation tiles),
    # sized so it also fits v7x's 64 MiB physical VMEM.
    est_bytes = 4 * (2 * ts * in_dim + 2 * Hp + 2 * ts * Hp
                     + 2 * (in_dim * Hp + 3 * Hp * Hp + 6 * Hp)
                     + 6 * ts * Hp)
    vmem_limit = max(16 << 20, min(48 << 20, int(1.5 * est_bytes)))

    out = pl.pallas_call(
        functools.partial(grn_kernel, out_dim=out_dim),
        out_shape=jax.ShapeDtypeStruct((B, S_pad, Hp), a.dtype),
        grid=grid,
        in_specs=in_specs,
        out_specs=out_specs,
        compiler_params=pltpu.CompilerParams(
            dimension_semantics=("parallel", "parallel"),
            vmem_limit_bytes=vmem_limit),
    )(x, ctx_proj, w_in, b_in, w_fc2, b_fc2,
      w_glu_a, b_glu_a, w_glu_b, b_glu_b, gamma, beta)

    return out[:, :S, :out_dim]


def grn_reference(a, context, p):
    """Pure-JAX reference mirroring the PyTorch forward."""
    h = a @ p["w_in"] + p["b_in"]
    residual = h
    ctx = context @ p["w_ctx"]
    h = h + ctx[:, None, :]
    h = jnp.where(h > 0, h, jnp.exp(h) - 1.0)
    h = h @ p["w_fc2"] + p["b_fc2"]
    g = h @ p["w_glu"] + p["b_glu"]
    out_dim = p["w_glu"].shape[1] // 2
    glu = g[..., :out_dim] * jax.nn.sigmoid(g[..., out_dim:])
    y = glu + residual
    mean = jnp.mean(y, axis=-1, keepdims=True)
    var = jnp.mean((y - mean) ** 2, axis=-1, keepdims=True)
    return (y - mean) / jnp.sqrt(var + 1e-5) * p["gamma"] + p["beta"]


def init_params(key, input_size, hidden_size, output_size, context_size):
    ks = jax.random.split(key, 8)
    s = 0.1
    return {
        "w_in":  s * jax.random.normal(ks[0], (input_size, hidden_size), jnp.float32),
        "b_in":  s * jax.random.normal(ks[1], (hidden_size,), jnp.float32),
        "w_ctx": s * jax.random.normal(ks[2], (context_size, hidden_size), jnp.float32),
        "w_fc2": s * jax.random.normal(ks[3], (hidden_size, hidden_size), jnp.float32),
        "b_fc2": s * jax.random.normal(ks[4], (hidden_size,), jnp.float32),
        "w_glu": s * jax.random.normal(ks[5], (hidden_size, 2 * output_size), jnp.float32),
        "b_glu": s * jax.random.normal(ks[6], (2 * output_size,), jnp.float32),
        "gamma": jnp.ones((hidden_size,), jnp.float32),
        "beta":  jnp.zeros((hidden_size,), jnp.float32),
    }


if __name__ == "__main__":
    # AddNorm(hidden_size) adds the GLU output (output_size) to the residual
    # (hidden_size), so output_size must equal hidden_size for the module to run.
    B, S = 2, 8
    input_size, hidden_size, output_size, context_size = 16, 32, 32, 8

    key = jax.random.PRNGKey(0)
    k_a, k_c, k_p = jax.random.split(key, 3)
    a = jax.random.normal(k_a, (B, S, input_size), jnp.float32)
    context = jax.random.normal(k_c, (B, context_size), jnp.float32)
    params = init_params(k_p, input_size, hidden_size, output_size, context_size)

    out = grn_forward(a, context, params)
    out = jax.block_until_ready(out)

    ref = grn_reference(a, context, params)
    assert out.shape == (B, S, output_size)
    assert jnp.allclose(out, ref, atol=1e-4, rtol=1e-4), "mismatch vs JAX reference"

    print("KERNEL_OK")
</pallas_src>

<mosaic_0001>
module attributes {stable_mosaic.version = 11 : i64} {
  func.func @grn_kernel(%arg0: i32, %arg1: i32, %arg2: memref<1x8x16xf32, #tpu.memory_space<vmem>>, %arg3: memref<1x1x128xf32, #tpu.memory_space<vmem>>, %arg4: memref<16x128xf32, #tpu.memory_space<vmem>>, %arg5: memref<1x128xf32, #tpu.memory_space<vmem>>, %arg6: memref<128x128xf32, #tpu.memory_space<vmem>>, %arg7: memref<1x128xf32, #tpu.memory_space<vmem>>, %arg8: memref<128x128xf32, #tpu.memory_space<vmem>>, %arg9: memref<1x128xf32, #tpu.memory_space<vmem>>, %arg10: memref<128x128xf32, #tpu.memory_space<vmem>>, %arg11: memref<1x128xf32, #tpu.memory_space<vmem>>, %arg12: memref<1x128xf32, #tpu.memory_space<vmem>>, %arg13: memref<1x128xf32, #tpu.memory_space<vmem>>, %arg14: memref<1x8x128xf32, #tpu.memory_space<vmem>>) attributes {dimension_semantics = [#tpu.dimension_semantics<parallel>, #tpu.dimension_semantics<parallel>], iteration_bounds = array<i64: 2, 1>, scalar_prefetch = 0 : i64, scratch_operands = 0 : i64, tpu.core_type = #tpu.core_type<tc>, window_params = [{transform_indices = @transform_0, window_bounds = array<i64: 1, 8, 16>}, {transform_indices = @transform_1, window_bounds = array<i64: 1, 1, 128>}, {pipeline_mode = #tpu.pipeline_mode<synchronous>, transform_indices = @transform_2, window_bounds = array<i64: 16, 128>}, {pipeline_mode = #tpu.pipeline_mode<synchronous>, transform_indices = @transform_3, window_bounds = array<i64: 1, 128>}, {pipeline_mode = #tpu.pipeline_mode<synchronous>, transform_indices = @transform_4, window_bounds = array<i64: 128, 128>}, {pipeline_mode = #tpu.pipeline_mode<synchronous>, transform_indices = @transform_5, window_bounds = array<i64: 1, 128>}, {pipeline_mode = #tpu.pipeline_mode<synchronous>, transform_indices = @transform_6, window_bounds = array<i64: 128, 128>}, {pipeline_mode = #tpu.pipeline_mode<synchronous>, transform_indices = @transform_7, window_bounds = array<i64: 1, 128>}, {pipeline_mode = #tpu.pipeline_mode<synchronous>, transform_indices = @transform_8, window_bounds = array<i64: 128, 128>}, {pipeline_mode = #tpu.pipeline_mode<synchronous>, transform_indices = @transform_9, window_bounds = array<i64: 1, 128>}, {pipeline_mode = #tpu.pipeline_mode<synchronous>, transform_indices = @transform_10, window_bounds = array<i64: 1, 128>}, {pipeline_mode = #tpu.pipeline_mode<synchronous>, transform_indices = @transform_11, window_bounds = array<i64: 1, 128>}, {transform_indices = @transform_12, window_bounds = array<i64: 1, 8, 128>}]} {
    %c0 = arith.constant 0 : index
    %c0_0 = arith.constant 0 : index
    %c0_1 = arith.constant 0 : index
    %0 = vector.load %arg2[%c0, %c0_0, %c0_1] : memref<1x8x16xf32, #tpu.memory_space<vmem>>, vector<1x8x16xf32>
    %1 = vector.shape_cast %0 : vector<1x8x16xf32> to vector<8x16xf32>
    %c0_2 = arith.constant 0 : index
    %c0_3 = arith.constant 0 : index
    %2 = vector.load %arg4[%c0_2, %c0_3] : memref<16x128xf32, #tpu.memory_space<vmem>>, vector<16x128xf32>
    %cst = arith.constant dense<0.000000e+00> : vector<8x128xf32>
    %3 = tpu.matmul %1, %2, %cst {dimension_numbers = #tpu.dot_dimension_numbers<[1], [0], [0], [1], [0, 0, 1, 1], [], []>} : vector<8x16xf32>, vector<16x128xf32>, vector<8x128xf32> -> vector<8x128xf32>
    %c0_4 = arith.constant 0 : index
    %c0_5 = arith.constant 0 : index
    %4 = vector.load %arg5[%c0_4, %c0_5] : memref<1x128xf32, #tpu.memory_space<vmem>>, vector<1x128xf32>
    %5 = vector.broadcast %4 : vector<1x128xf32> to vector<8x128xf32>
    %6 = arith.addf %3, %5 : vector<8x128xf32>
    %c0_6 = arith.constant 0 : index
    %c0_7 = arith.constant 0 : index
    %c0_8 = arith.constant 0 : index
    %7 = vector.load %arg3[%c0_6, %c0_7, %c0_8] : memref<1x1x128xf32, #tpu.memory_space<vmem>>, vector<1x1x128xf32>
    %8 = vector.shape_cast %7 : vector<1x1x128xf32> to vector<1x128xf32>
    %9 = vector.broadcast %8 : vector<1x128xf32> to vector<8x128xf32>
    %10 = arith.addf %6, %9 : vector<8x128xf32>
    %cst_9 = arith.constant 0.000000e+00 : f32
    %11 = vector.broadcast %cst_9 : f32 to vector<8x128xf32>
    %12 = arith.cmpf ogt, %10, %11 : vector<8x128xf32>
    %cst_10 = arith.constant 0.000000e+00 : f32
    %13 = vector.broadcast %cst_10 : f32 to vector<8x128xf32>
    %14 = arith.minimumf %10, %13 : vector<8x128xf32>
    %15 = math.exp %14 : vector<8x128xf32>
    %cst_11 = arith.constant 1.000000e+00 : f32
    %16 = vector.broadcast %cst_11 : f32 to vector<8x128xf32>
    %17 = arith.subf %15, %16 : vector<8x128xf32>
    %18 = arith.select %12, %10, %17 : vector<8x128xi1>, vector<8x128xf32>
    %c0_12 = arith.constant 0 : index
    %c0_13 = arith.constant 0 : index
    %19 = vector.load %arg6[%c0_12, %c0_13] : memref<128x128xf32, #tpu.memory_space<vmem>>, vector<128x128xf32>
    %cst_14 = arith.constant dense<0.000000e+00> : vector<8x128xf32>
    %20 = tpu.matmul %18, %19, %cst_14 {dimension_numbers = #tpu.dot_dimension_numbers<[1], [0], [0], [1], [0, 0, 1, 1], [], []>} : vector<8x128xf32>, vector<128x128xf32>, vector<8x128xf32> -> vector<8x128xf32>
    %c0_15 = arith.constant 0 : index
    %c0_16 = arith.constant 0 : index
    %21 = vector.load %arg7[%c0_15, %c0_16] : memref<1x128xf32, #tpu.memory_space<vmem>>, vector<1x128xf32>
    %22 = vector.broadcast %21 : vector<1x128xf32> to vector<8x128xf32>
    %23 = arith.addf %20, %22 : vector<8x128xf32>
    %c0_17 = arith.constant 0 : index
    %c0_18 = arith.constant 0 : index
    %24 = vector.load %arg8[%c0_17, %c0_18] : memref<128x128xf32, #tpu.memory_space<vmem>>, vector<128x128xf32>
    %cst_19 = arith.constant dense<0.000000e+00> : vector<8x128xf32>
    %25 = tpu.matmul %23, %24, %cst_19 {dimension_numbers = #tpu.dot_dimension_numbers<[1], [0], [0], [1], [0, 0, 1, 1], [], []>} : vector<8x128xf32>, vector<128x128xf32>, vector<8x128xf32> -> vector<8x128xf32>
    %c0_20 = arith.constant 0 : index
    %c0_21 = arith.constant 0 : index
    %26 = vector.load %arg9[%c0_20, %c0_21] : memref<1x128xf32, #tpu.memory_space<vmem>>, vector<1x128xf32>
    %27 = vector.broadcast %26 : vector<1x128xf32> to vector<8x128xf32>
    %28 = arith.addf %25, %27 : vector<8x128xf32>
    %c0_22 = arith.constant 0 : index
    %c0_23 = arith.constant 0 : index
    %29 = vector.load %arg10[%c0_22, %c0_23] : memref<128x128xf32, #tpu.memory_space<vmem>>, vector<128x128xf32>
    %cst_24 = arith.constant dense<0.000000e+00> : vector<8x128xf32>
    %30 = tpu.matmul %23, %29, %cst_24 {dimension_numbers = #tpu.dot_dimension_numbers<[1], [0], [0], [1], [0, 0, 1, 1], [], []>} : vector<8x128xf32>, vector<128x128xf32>, vector<8x128xf32> -> vector<8x128xf32>
    %c0_25 = arith.constant 0 : index
    %c0_26 = arith.constant 0 : index
    %31 = vector.load %arg11[%c0_25, %c0_26] : memref<1x128xf32, #tpu.memory_space<vmem>>, vector<1x128xf32>
    %32 = vector.broadcast %31 : vector<1x128xf32> to vector<8x128xf32>
    %33 = arith.addf %30, %32 : vector<8x128xf32>
    %34 = arith.negf %33 : vector<8x128xf32>
    %35 = math.exp %34 : vector<8x128xf32>
    %cst_27 = arith.constant 1.000000e+00 : f32
    %36 = vector.broadcast %cst_27 : f32 to vector<8x128xf32>
    %37 = arith.addf %36, %35 : vector<8x128xf32>
    %38 = arith.divf %36, %37 : vector<8x128xf32>
    %39 = arith.mulf %28, %38 : vector<8x128xf32>
    %40 = arith.addf %39, %6 : vector<8x128xf32>
    %41 = tpu.iota {dimensions = array<i32: 1>} : vector<1x128xi32>
    %c32_i32 = arith.constant 32 : i32
    %42 = vector.broadcast %c32_i32 : i32 to vector<1x128xi32>
    %43 = arith.cmpi slt, %41, %42 : vector<1x128xi32>
    %cst_28 = arith.constant dense<0.000000e+00> : vector<8xf32>
    %44 = vector.multi_reduction <add>, %40, %cst_28 [1] : vector<8x128xf32> to vector<8xf32>
    %45 = vector.shape_cast %44 : vector<8xf32> to vector<8x1xf32>
    %cst_29 = arith.constant 3.125000e-02 : f32
    %46 = vector.broadcast %cst_29 : f32 to vector<8x1xf32>
    %47 = arith.mulf %45, %46 : vector<8x1xf32>
    %48 = vector.broadcast %47 : vector<8x1xf32> to vector<8x128xf32>
    %49 = arith.subf %40, %48 : vector<8x128xf32>
    %cst_30 = arith.constant 0.000000e+00 : f32
    %50 = vector.shape_cast %43 : vector<1x128xi1> to vector<1x128xi1>
    %51 = vector.broadcast %50 : vector<1x128xi1> to vector<8x128xi1>
    %52 = vector.broadcast %cst_30 : f32 to vector<8x128xf32>
    %53 = arith.select %51, %49, %52 : vector<8x128xi1>, vector<8x128xf32>
    %54 = arith.mulf %53, %53 : vector<8x128xf32>
    %cst_31 = arith.constant dense<0.000000e+00> : vector<8xf32>
    %55 = vector.multi_reduction <add>, %54, %cst_31 [1] : vector<8x128xf32> to vector<8xf32>
    %56 = vector.shape_cast %55 : vector<8xf32> to vector<8x1xf32>
    %cst_32 = arith.constant 3.125000e-02 : f32
    %57 = vector.broadcast %cst_32 : f32 to vector<8x1xf32>
    %58 = arith.mulf %56, %57 : vector<8x1xf32>
    %cst_33 = arith.constant 9.99999974E-6 : f32
    %59 = vector.broadcast %cst_33 : f32 to vector<8x1xf32>
    %60 = arith.addf %58, %59 : vector<8x1xf32>
    %61 = math.rsqrt %60 : vector<8x1xf32>
    %62 = vector.broadcast %61 : vector<8x1xf32> to vector<8x128xf32>
    %63 = arith.mulf %53, %62 : vector<8x128xf32>
    %c0_34 = arith.constant 0 : index
    %c0_35 = arith.constant 0 : index
    %64 = vector.load %arg12[%c0_34, %c0_35] : memref<1x128xf32, #tpu.memory_space<vmem>>, vector<1x128xf32>
    %65 = vector.broadcast %64 : vector<1x128xf32> to vector<8x128xf32>
    %66 = arith.mulf %63, %65 : vector<8x128xf32>
    %c0_36 = arith.constant 0 : index
    %c0_37 = arith.constant 0 : index
    %67 = vector.load %arg13[%c0_36, %c0_37] : memref<1x128xf32, #tpu.memory_space<vmem>>, vector<1x128xf32>
    %68 = vector.broadcast %67 : vector<1x128xf32> to vector<8x128xf32>
    %69 = arith.addf %66, %68 : vector<8x128xf32>
    %c0_38 = arith.constant 0 : index
    %c0_39 = arith.constant 0 : index
    %c0_40 = arith.constant 0 : index
    %70 = vector.load %arg14[%c0_38, %c0_39, %c0_40] : memref<1x8x128xf32, #tpu.memory_space<vmem>>, vector<1x8x128xf32>
    %71 = vector.shape_cast %70 : vector<1x8x128xf32> to vector<8x128xf32>
    %72 = vector.shape_cast %69 : vector<8x128xf32> to vector<1x8x128xf32>
    tpu.vector_store %arg14[%c0_38, %c0_39, %c0_40], %72 {strides = array<i32>} : memref<1x8x128xf32, #tpu.memory_space<vmem>>, vector<1x8x128xf32>,
    return
  }
  func.func @transform_0(%arg0: i32, %arg1: i32) -> (i32, i32, i32) {
    %c0_i32 = arith.constant 0 : i32
    %c0_i32_0 = arith.constant 0 : i32
    return %arg0, %arg1, %c0_i32 : i32, i32, i32
  }
  func.func @transform_1(%arg0: i32, %arg1: i32) -> (i32, i32, i32) {
    %c0_i32 = arith.constant 0 : i32
    %c0_i32_0 = arith.constant 0 : i32
    %c0_i32_1 = arith.constant 0 : i32
    return %arg0, %c0_i32, %c0_i32_0 : i32, i32, i32
  }
  func.func @transform_2(%arg0: i32, %arg1: i32) -> (i32, i32) {
    %c0_i32 = arith.constant 0 : i32
    %c0_i32_0 = arith.constant 0 : i32
    %c0_i32_1 = arith.constant 0 : i32
    return %c0_i32, %c0_i32_0 : i32, i32
  }
  func.func @transform_3(%arg0: i32, %arg1: i32) -> (i32, i32) {
    %c0_i32 = arith.constant 0 : i32
    %c0_i32_0 = arith.constant 0 : i32
    %c0_i32_1 = arith.constant 0 : i32
    return %c0_i32, %c0_i32_0 : i32, i32
  }
  func.func @transform_4(%arg0: i32, %arg1: i32) -> (i32, i32) {
    %c0_i32 = arith.constant 0 : i32
    %c0_i32_0 = arith.constant 0 : i32
    %c0_i32_1 = arith.constant 0 : i32
    return %c0_i32, %c0_i32_0 : i32, i32
  }
  func.func @transform_5(%arg0: i32, %arg1: i32) -> (i32, i32) {
    %c0_i32 = arith.constant 0 : i32
    %c0_i32_0 = arith.constant 0 : i32
    %c0_i32_1 = arith.constant 0 : i32
    return %c0_i32, %c0_i32_0 : i32, i32
  }
  func.func @transform_6(%arg0: i32, %arg1: i32) -> (i32, i32) {
    %c0_i32 = arith.constant 0 : i32
    %c0_i32_0 = arith.constant 0 : i32
    %c0_i32_1 = arith.constant 0 : i32
    return %c0_i32, %c0_i32_0 : i32, i32
  }
  func.func @transform_7(%arg0: i32, %arg1: i32) -> (i32, i32) {
    %c0_i32 = arith.constant 0 : i32
    %c0_i32_0 = arith.constant 0 : i32
    %c0_i32_1 = arith.constant 0 : i32
    return %c0_i32, %c0_i32_0 : i32, i32
  }
  func.func @transform_8(%arg0: i32, %arg1: i32) -> (i32, i32) {
    %c0_i32 = arith.constant 0 : i32
    %c0_i32_0 = arith.constant 0 : i32
    %c0_i32_1 = arith.constant 0 : i32
    return %c0_i32, %c0_i32_0 : i32, i32
  }
  func.func @transform_9(%arg0: i32, %arg1: i32) -> (i32, i32) {
    %c0_i32 = arith.constant 0 : i32
    %c0_i32_0 = arith.constant 0 : i32
    %c0_i32_1 = arith.constant 0 : i32
    return %c0_i32, %c0_i32_0 : i32, i32
  }
  func.func @transform_10(%arg0: i32, %arg1: i32) -> (i32, i32) {
    %c0_i32 = arith.constant 0 : i32
    %c0_i32_0 = arith.constant 0 : i32
    %c0_i32_1 = arith.constant 0 : i32
    return %c0_i32, %c0_i32_0 : i32, i32
  }
  func.func @transform_11(%arg0: i32, %arg1: i32) -> (i32, i32) {
    %c0_i32 = arith.constant 0 : i32
    %c0_i32_0 = arith.constant 0 : i32
    %c0_i32_1 = arith.constant 0 : i32
    return %c0_i32, %c0_i32_0 : i32, i32
  }
  func.func @transform_12(%arg0: i32, %arg1: i32) -> (i32, i32, i32) {
    %c0_i32 = arith.constant 0 : i32
    %c0_i32_0 = arith.constant 0 : i32
    return %arg0, %arg1, %c0_i32 : i32, i32, i32
  }
}

</mosaic_0001>

<llo_original>
// kernel: grn_forward.1
$region0: #{grn_forward.1}
  #allocation0 [shape = 'u32[]', space=smem, size = 0x4, offset = 0x4, fixed_abs, tag = 'smem constant byte address 0x4 - core index']
  #allocation1 [shape = 'u32[144,128]{1,0:T(1,128)}', space=vmem, size = 0x12000, scoped, tag = 'internal scratch']
  %s0 = inlined_call_operand.vmem [shape: f32[2,8,16], index: 0, kind: input, shape index: {}]
  %s1 = inlined_call_operand.vmem [shape: f32[2,1,128], index: 1, kind: input, shape index: {}]
  %s2 = inlined_call_operand.vmem [shape: f32[16,128], index: 2, kind: input, shape index: {}]
  %s3 = inlined_call_operand.vmem [shape: f32[1,128], index: 3, kind: input, shape index: {}]
  %s4 = inlined_call_operand.vmem [shape: f32[128,128], index: 4, kind: input, shape index: {}]
  %s5 = inlined_call_operand.vmem [shape: f32[1,128], index: 5, kind: input, shape index: {}]
  %s6 = inlined_call_operand.vmem [shape: f32[128,128], index: 6, kind: input, shape index: {}]
  %s7 = inlined_call_operand.vmem [shape: f32[1,128], index: 7, kind: input, shape index: {}]
  %s8 = inlined_call_operand.vmem [shape: f32[128,128], index: 8, kind: input, shape index: {}]
  %s9 = inlined_call_operand.vmem [shape: f32[1,128], index: 9, kind: input, shape index: {}]
  %s10 = inlined_call_operand.vmem [shape: f32[1,128], index: 10, kind: input, shape index: {}]
  %s11 = inlined_call_operand.vmem [shape: f32[1,128], index: 11, kind: input, shape index: {}]
  %s12 = inlined_call_operand.hbm [shape: f32[2,8,128], index: 12, kind: output, shape index: {}]
  %s13 = sld [smem:[#allocation0]]
  $region81: #{grn_forward.1} parent=0
    _
  %s15 = ssub.s32 1, %s13
  %s16 = scalar_select 0, %s15, %s13
  $region1: #{grn_forward.1} parent=0
    #allocation2 [shape = 'u8[8192]{0}', space=vmem, size = 0x2000, scoped, tag = 'output window, operand 0']
    #allocation3 [shape = 's32[2]{0}', space=sflag, size = 0x8, scoped, tag = 'scoped memory for grn_forward.1']
    %17 = vsyncpa [#allocation3], 0
    %s18 = scalar_lea.sflag [#allocation3], 1
    %19 = vsyncpa %s18, 0
    loop: start=0, step=1, limit=4
    $region2: #{grn_forward.1} parent=1 // loop_pre_header
      _
    $region3: #{grn_forward.1} parent=1 // loop_header
      %s21 = sphi 0, %s25
      %p22 = scmp.ge.s32.totalorder %s21, 4
      %s28 = sphi 0, %s40
      %s29 = sphi 0, %s36
      %s30 = sphi 0, %s28
      %s31 = sphi 0, %s29
      %s32 = sphi 0, %s30
      %s33 = sphi 0, %s31
      %s45 = sphi 0, %s47
      %s48 = sphi 0, %s45
      %s49 = sphi 0, %s48
      %s65 = sphi 0, %s49
      %s71 = sphi 0, %s73
      %s74 = sphi 0, %s71
      %s75 = sphi 0, %s74
      %s91 = sphi 0, %s75
      %s95 = sphi 0, %s95
      %s97 = sphi 0, %s95
      %s98 = sphi 0, %s97
      %s112 = sphi 0, %s98
      %s116 = sphi 0, %s116
      %s118 = sphi 0, %s116
      %s119 = sphi 0, %s118
      %s133 = sphi 0, %s119
      %s137 = sphi 0, %s137
      %s139 = sphi 0, %s137
      %s140 = sphi 0, %s139
      %s154 = sphi 0, %s140
      %s158 = sphi 0, %s158
      %s160 = sphi 0, %s158
      %s161 = sphi 0, %s160
      %s175 = sphi 0, %s161
      %s179 = sphi 0, %s179
      %s181 = sphi 0, %s179
      %s182 = sphi 0, %s181
      %s196 = sphi 0, %s182
      %s200 = sphi 0, %s200
      %s202 = sphi 0, %s200
      %s203 = sphi 0, %s202
      %s217 = sphi 0, %s203
      %s221 = sphi 0, %s221
      %s223 = sphi 0, %s221
      %s224 = sphi 0, %s223
      %s238 = sphi 0, %s224
      %s242 = sphi 0, %s242
      %s244 = sphi 0, %s242
      %s245 = sphi 0, %s244
      %s259 = sphi 0, %s245
      %s263 = sphi 0, %s263
      %s265 = sphi 0, %s263
      %s266 = sphi 0, %s265
      %s280 = sphi 0, %s266
      %s284 = sphi 0, %s284
      %s286 = sphi 0, %s284
      %s287 = sphi 0, %s286
      %s301 = sphi 0, %s287
      %s309 = sphi 0, %s311
      %s312 = sphi 0, %s309
      %s313 = sphi 0, %s312
      %s329 = sphi 0, %s313
    $region4: #{grn_forward.1} parent=1 // loop_header_branch
      %24 = sbr.rel (%p22) target = $region8
    $region5: #{grn_forward.1} parent=1 // loop_body
      %s26 = ssub.s32 %s21, 1
      %s27 = ssub.s32 %s21, 2
      %s34 = sadd.s32 1, %s29
      %p35 = scmp.ge.s32.totalorder %s34, 1
      %s36 = scalar_select %p35, 0, %s34
      %s37 = sadd.s32 1, %s28
      %s38 = scalar_select %p35, %s37, %s28
      %p39 = scmp.ge.s32.totalorder %s38, 2
      %s40 = scalar_select %p39, 0, %s38
      %s41 = ssub.s32 %s28, %s40
      %s42 = ssub.s32 %s29, %s36
      %s43 = sor.u32 %s41, %s42
      %p44 = scmp.eq.s32.totalorder %s43, 0
      %s46 = sadd.s32 %s45, 1
      %s47 = scalar_select %p44, %s45, %s46
      %p50 = pneg %p44
      %p51 = scmp.eq.s32.totalorder %s21, 1
      %p52 = por %p50, %p51
      %p53 = scmp.ne.s32.totalorder %s45, %s48
      %p54 = scmp.eq.s32.totalorder %s21, 0
      %p55 = por %p53, %p54
      %p56 = scmp.ne.s32.totalorder %s45, %s48
      %p57 = scmp.eq.s32.totalorder %s26, 1
      %p58 = por %p56, %p57
      %p59 = scmp.ne.s32.totalorder %s48, %s49
      %p60 = scmp.eq.s32.totalorder %s26, 0
      %p61 = por %p59, %p60
      %p62 = scmp.ne.s32.totalorder %s48, %s49
      %p63 = scmp.eq.s32.totalorder %s27, 1
      %p64 = por %p62, %p63
      %p66 = scmp.ne.s32.totalorder %s49, %s65
      %p67 = scmp.eq.s32.totalorder %s27, 0
      %p68 = por %p66, %p67
      %s69 = ssub.s32 %s28, %s40
      %p70 = scmp.eq.s32.totalorder %s69, 0
      %s72 = sadd.s32 %s71, 1
      %s73 = scalar_select %p70, %s71, %s72
      %p76 = pneg %p70
      %p77 = scmp.eq.s32.totalorder %s21, 1
      %p78 = por %p76, %p77
      %p79 = scmp.ne.s32.totalorder %s71, %s74
      %p80 = scmp.eq.s32.totalorder %s21, 0
      %p81 = por %p79, %p80
      %p82 = scmp.ne.s32.totalorder %s71, %s74
      %p83 = scmp.eq.s32.totalorder %s26, 1
      %p84 = por %p82, %p83
      %p85 = scmp.ne.s32.totalorder %s74, %s75
      %p86 = scmp.eq.s32.totalorder %s26, 0
      %p87 = por %p85, %p86
      %p88 = scmp.ne.s32.totalorder %s74, %s75
      %p89 = scmp.eq.s32.totalorder %s27, 1
      %p90 = por %p88, %p89
      %p92 = scmp.ne.s32.totalorder %s75, %s91
      %p93 = scmp.eq.s32.totalorder %s27, 0
      %p94 = por %p92, %p93
      %s96 = sadd.s32 %s95, 1
      %p99 = scmp.eq.s32.totalorder %s21, 1
      %p100 = scmp.ne.s32.totalorder %s95, %s97
      %p101 = scmp.eq.s32.totalorder %s21, 0
      %p102 = por %p100, %p101
      %p103 = scmp.ne.s32.totalorder %s95, %s97
      %p104 = scmp.eq.s32.totalorder %s26, 1
      %p105 = por %p103, %p104
      %p106 = scmp.ne.s32.totalorder %s97, %s98
      %p107 = scmp.eq.s32.totalorder %s26, 0
      %p108 = por %p106, %p107
      %p109 = scmp.ne.s32.totalorder %s97, %s98
      %p110 = scmp.eq.s32.totalorder %s27, 1
      %p111 = por %p109, %p110
      %p113 = scmp.ne.s32.totalorder %s98, %s112
      %p114 = scmp.eq.s32.totalorder %s27, 0
      %p115 = por %p113, %p114
      %s117 = sadd.s32 %s116, 1
      %p120 = scmp.eq.s32.totalorder %s21, 1
      %p121 = scmp.ne.s32.totalorder %s116, %s118
      %p122 = scmp.eq.s32.totalorder %s21, 0
      %p123 = por %p121, %p122
      %p124 = scmp.ne.s32.totalorder %s116, %s118
      %p125 = scmp.eq.s32.totalorder %s26, 1
      %p126 = por %p124, %p125
      %p127 = scmp.ne.s32.totalorder %s118, %s119
      %p128 = scmp.eq.s32.totalorder %s26, 0
      %p129 = por %p127, %p128
      %p130 = scmp.ne.s32.totalorder %s118, %s119
      %p131 = scmp.eq.s32.totalorder %s27, 1
      %p132 = por %p130, %p131
      %p134 = scmp.ne.s32.totalorder %s119, %s133
      %p135 = scmp.eq.s32.totalorder %s27, 0
      %p136 = por %p134, %p135
      %s138 = sadd.s32 %s137, 1
      %p141 = scmp.eq.s32.totalorder %s21, 1
      %p142 = scmp.ne.s32.totalorder %s137, %s139
      %p143 = scmp.eq.s32.totalorder %s21, 0
      %p144 = por %p142, %p143
      %p145 = scmp.ne.s32.totalorder %s137, %s139
      %p146 = scmp.eq.s32.totalorder %s26, 1
      %p147 = por %p145, %p146
      %p148 = scmp.ne.s32.totalorder %s139, %s140
      %p149 = scmp.eq.s32.totalorder %s26, 0
      %p150 = por %p148, %p149
      %p151 = scmp.ne.s32.totalorder %s139, %s140
      %p152 = scmp.eq.s32.totalorder %s27, 1
      %p153 = por %p151, %p152
      %p155 = scmp.ne.s32.totalorder %s140, %s154
      %p156 = scmp.eq.s32.totalorder %s27, 0
      %p157 = por %p155, %p156
      %s159 = sadd.s32 %s158, 1
      %p162 = scmp.eq.s32.totalorder %s21, 1
      %p163 = scmp.ne.s32.totalorder %s158, %s160
      %p164 = scmp.eq.s32.totalorder %s21, 0
      %p165 = por %p163, %p164
      %p166 = scmp.ne.s32.totalorder %s158, %s160
      %p167 = scmp.eq.s32.totalorder %s26, 1
      %p168 = por %p166, %p167
      %p169 = scmp.ne.s32.totalorder %s160, %s161
      %p170 = scmp.eq.s32.totalorder %s26, 0
      %p171 = por %p169, %p170
      %p172 = scmp.ne.s32.totalorder %s160, %s161
      %p173 = scmp.eq.s32.totalorder %s27, 1
      %p174 = por %p172, %p173
      %p176 = scmp.ne.s32.totalorder %s161, %s175
      %p177 = scmp.eq.s32.totalorder %s27, 0
      %p178 = por %p176, %p177
      %s180 = sadd.s32 %s179, 1
      %p183 = scmp.eq.s32.totalorder %s21, 1
      %p184 = scmp.ne.s32.totalorder %s179, %s181
      %p185 = scmp.eq.s32.totalorder %s21, 0
      %p186 = por %p184, %p185
      %p187 = scmp.ne.s32.totalorder %s179, %s181
      %p188 = scmp.eq.s32.totalorder %s26, 1
      %p189 = por %p187, %p188
      %p190 = scmp.ne.s32.totalorder %s181, %s182
      %p191 = scmp.eq.s32.totalorder %s26, 0
      %p192 = por %p190, %p191
      %p193 = scmp.ne.s32.totalorder %s181, %s182
      %p194 = scmp.eq.s32.totalorder %s27, 1
      %p195 = por %p193, %p194
      %p197 = scmp.ne.s32.totalorder %s182, %s196
      %p198 = scmp.eq.s32.totalorder %s27, 0
      %p199 = por %p197, %p198
      %s201 = sadd.s32 %s200, 1
      %p204 = scmp.eq.s32.totalorder %s21, 1
      %p205 = scmp.ne.s32.totalorder %s200, %s202
      %p206 = scmp.eq.s32.totalorder %s21, 0
      %p207 = por %p205, %p206
      %p208 = scmp.ne.s32.totalorder %s200, %s202
      %p209 = scmp.eq.s32.totalorder %s26, 1
      %p210 = por %p208, %p209
      %p211 = scmp.ne.s32.totalorder %s202, %s203
      %p212 = scmp.eq.s32.totalorder %s26, 0
      %p213 = por %p211, %p212
      %p214 = scmp.ne.s32.totalorder %s202, %s203
      %p215 = scmp.eq.s32.totalorder %s27, 1
      %p216 = por %p214, %p215
      %p218 = scmp.ne.s32.totalorder %s203, %s217
      %p219 = scmp.eq.s32.totalorder %s27, 0
      %p220 = por %p218, %p219
      %s222 = sadd.s32 %s221, 1
      %p225 = scmp.eq.s32.totalorder %s21, 1
      %p226 = scmp.ne.s32.totalorder %s221, %s223
      %p227 = scmp.eq.s32.totalorder %s21, 0
      %p228 = por %p226, %p227
      %p229 = scmp.ne.s32.totalorder %s221, %s223
      %p230 = scmp.eq.s32.totalorder %s26, 1
      %p231 = por %p229, %p230
      %p232 = scmp.ne.s32.totalorder %s223, %s224
      %p233 = scmp.eq.s32.totalorder %s26, 0
      %p234 = por %p232, %p233
      %p235 = scmp.ne.s32.totalorder %s223, %s224
      %p236 = scmp.eq.s32.totalorder %s27, 1
      %p237 = por %p235, %p236
      %p239 = scmp.ne.s32.totalorder %s224, %s238
      %p240 = scmp.eq.s32.totalorder %s27, 0
      %p241 = por %p239, %p240
      %s243 = sadd.s32 %s242, 1
      %p246 = scmp.eq.s32.totalorder %s21, 1
      %p247 = scmp.ne.s32.totalorder %s242, %s244
      %p248 = scmp.eq.s32.totalorder %s21, 0
      %p249 = por %p247, %p248
      %p250 = scmp.ne.s32.totalorder %s242, %s244
      %p251 = scmp.eq.s32.totalorder %s26, 1
      %p252 = por %p250, %p251
      %p253 = scmp.ne.s32.totalorder %s244, %s245
      %p254 = scmp.eq.s32.totalorder %s26, 0
      %p255 = por %p253, %p254
      %p256 = scmp.ne.s32.totalorder %s244, %s245
      %p257 = scmp.eq.s32.totalorder %s27, 1
      %p258 = por %p256, %p257
      %p260 = scmp.ne.s32.totalorder %s245, %s259
      %p261 = scmp.eq.s32.totalorder %s27, 0
      %p262 = por %p260, %p261
      %s264 = sadd.s32 %s263, 1
      %p267 = scmp.eq.s32.totalorder %s21, 1
      %p268 = scmp.ne.s32.totalorder %s263, %s265
      %p269 = scmp.eq.s32.totalorder %s21, 0
      %p270 = por %p268, %p269
      %p271 = scmp.ne.s32.totalorder %s263, %s265
      %p272 = scmp.eq.s32.totalorder %s26, 1
      %p273 = por %p271, %p272
      %p274 = scmp.ne.s32.totalorder %s265, %s266
      %p275 = scmp.eq.s32.totalorder %s26, 0
      %p276 = por %p274, %p275
      %p277 = scmp.ne.s32.totalorder %s265, %s266
      %p278 = scmp.eq.s32.totalorder %s27, 1
      %p279 = por %p277, %p278
      %p281 = scmp.ne.s32.totalorder %s266, %s280
      %p282 = scmp.eq.s32.totalorder %s27, 0
      %p283 = por %p281, %p282
      %s285 = sadd.s32 %s284, 1
      %p288 = scmp.eq.s32.totalorder %s21, 1
      %p289 = scmp.ne.s32.totalorder %s284, %s286
      %p290 = scmp.eq.s32.totalorder %s21, 0
      %p291 = por %p289, %p290
      %p292 = scmp.ne.s32.totalorder %s284, %s286
      %p293 = scmp.eq.s32.totalorder %s26, 1
      %p294 = por %p292, %p293
      %p295 = scmp.ne.s32.totalorder %s286, %s287
      %p296 = scmp.eq.s32.totalorder %s26, 0
      %p297 = por %p295, %p296
      %p298 = scmp.ne.s32.totalorder %s286, %s287
      %p299 = scmp.eq.s32.totalorder %s27, 1
      %p300 = por %p298, %p299
      %p302 = scmp.ne.s32.totalorder %s287, %s301
      %p303 = scmp.eq.s32.totalorder %s27, 0
      %p304 = por %p302, %p303
      %s305 = ssub.s32 %s28, %s40
      %s306 = ssub.s32 %s29, %s36
      %s307 = sor.u32 %s305, %s306
      %p308 = scmp.eq.s32.totalorder %s307, 0
      %s310 = sadd.s32 %s309, 1
      %s311 = scalar_select %p308, %s309, %s310
      %p314 = pneg %p308
      %p315 = scmp.eq.s32.totalorder %s21, 1
      %p316 = por %p314, %p315
      %p317 = scmp.ne.s32.totalorder %s309, %s312
      %p318 = scmp.eq.s32.totalorder %s21, 0
      %p319 = por %p317, %p318
      %p320 = scmp.ne.s32.totalorder %s309, %s312
      %p321 = scmp.eq.s32.totalorder %s26, 1
      %p322 = por %p320, %p321
      %p323 = scmp.ne.s32.totalorder %s312, %s313
      %p324 = scmp.eq.s32.totalorder %s26, 0
      %p325 = por %p323, %p324
      %p326 = scmp.ne.s32.totalorder %s312, %s313
      %p327 = scmp.eq.s32.totalorder %s27, 1
      %p328 = por %p326, %p327
      %p330 = scmp.ne.s32.totalorder %s313, %s329
      %p331 = scmp.eq.s32.totalorder %s27, 0
      %p332 = por %p330, %p331
      %p333 = scmp.le.s32.totalorder 1, %s21
      %p334 = scmp.lt.s32.totalorder %s21, 3
      %p335 = pnand %p333, %p334
      %p336 = pneg %p335
      // Predicated region
      $region9: #{grn_forward.1} parent=5 // pred_check
        _
      $region10: #{grn_forward.1} parent=5 // pred_check_branch
        %338 = sbr.rel (%p335) target = $region12
      $region11: #{grn_forward.1} parent=5 // pred_region
        %s339 = ssub.s32 %s21, 1
        // Predicated region
        $region13: #{grn_forward.1} parent=11 // pred_check
          %p340 = pneg %p108
        $region14: #{grn_forward.1} parent=11 // pred_check_branch
          %342 = sbr.rel (%p340) target = $region16
        $region15: #{grn_forward.1} parent=11 // pred_region
          _
        $region16: #{grn_forward.1} parent=11 // pred_fallthru
          _
        // Predicated region
        $region17: #{grn_forward.1} parent=11 // pred_check
          %p343 = pneg %p129
        $region18: #{grn_forward.1} parent=11 // pred_check_branch
          %345 = sbr.rel (%p343) target = $region20
        $region19: #{grn_forward.1} parent=11 // pred_region
          _
        $region20: #{grn_forward.1} parent=11 // pred_fallthru
          _
        // Predicated region
        $region21: #{grn_forward.1} parent=11 // pred_check
          %p346 = pneg %p150
        $region22: #{grn_forward.1} parent=11 // pred_check_branch
          %348 = sbr.rel (%p346) target = $region24
        $region23: #{grn_forward.1} parent=11 // pred_region
          _
        $region24: #{grn_forward.1} parent=11 // pred_fallthru
          _
        // Predicated region
        $region25: #{grn_forward.1} parent=11 // pred_check
          %p349 = pneg %p171
        $region26: #{grn_forward.1} parent=11 // pred_check_branch
          %351 = sbr.rel (%p349) target = $region28
        $region27: #{grn_forward.1} parent=11 // pred_region
          _
        $region28: #{grn_forward.1} parent=11 // pred_fallthru
          _
        // Predicated region
        $region29: #{grn_forward.1} parent=11 // pred_check
          %p352 = pneg %p192
        $region30: #{grn_forward.1} parent=11 // pred_check_branch
          %354 = sbr.rel (%p352) target = $region32
        $region31: #{grn_forward.1} parent=11 // pred_region
          _
        $region32: #{grn_forward.1} parent=11 // pred_fallthru
          _
        // Predicated region
        $region33: #{grn_forward.1} parent=11 // pred_check
          %p355 = pneg %p213
        $region34: #{grn_forward.1} parent=11 // pred_check_branch
          %357 = sbr.rel (%p355) target = $region36
        $region35: #{grn_forward.1} parent=11 // pred_region
          _
        $region36: #{grn_forward.1} parent=11 // pred_fallthru
          _
        // Predicated region
        $region37: #{grn_forward.1} parent=11 // pred_check
          %p358 = pneg %p234
        $region38: #{grn_forward.1} parent=11 // pred_check_branch
          %360 = sbr.rel (%p358) target = $region40
        $region39: #{grn_forward.1} parent=11 // pred_region
          _
        $region40: #{grn_forward.1} parent=11 // pred_fallthru
          _
        // Predicated region
        $region41: #{grn_forward.1} parent=11 // pred_check
          %p361 = pneg %p255
        $region42: #{grn_forward.1} parent=11 // pred_check_branch
          %363 = sbr.rel (%p361) target = $region44
        $region43: #{grn_forward.1} parent=11 // pred_region
          _
        $region44: #{grn_forward.1} parent=11 // pred_fallthru
          _
        // Predicated region
        $region45: #{grn_forward.1} parent=11 // pred_check
          %p364 = pneg %p276
        $region46: #{grn_forward.1} parent=11 // pred_check_branch
          %366 = sbr.rel (%p364) target = $region48
        $region47: #{grn_forward.1} parent=11 // pred_region
          _
        $region48: #{grn_forward.1} parent=11 // pred_fallthru
          _
        // Predicated region
        $region49: #{grn_forward.1} parent=11 // pred_check
          %p367 = pneg %p297
        $region50: #{grn_forward.1} parent=11 // pred_check_branch
          %369 = sbr.rel (%p367) target = $region52
        $region51: #{grn_forward.1} parent=11 // pred_region
          _
        $region52: #{grn_forward.1} parent=11 // pred_fallthru
          _
      $region12: #{grn_forward.1} parent=5 // pred_fallthru
        _
      %p370 = scmp.lt.s32.totalorder %s21, 2
      // Predicated region
      $region53: #{grn_forward.1} parent=5 // pred_check
        %p371 = pneg %p370
      $region54: #{grn_forward.1} parent=5 // pred_check_branch
        %373 = sbr.rel (%p371) target = $region56
      $region55: #{grn_forward.1} parent=5 // pred_region
        // Predicated region
        $region57: #{grn_forward.1} parent=55 // pred_check
          %p374 = pneg %p55
        $region58: #{grn_forward.1} parent=55 // pred_check_branch
          %376 = sbr.rel (%p374) target = $region60
        $region59: #{grn_forward.1} parent=55 // pred_region
          %p377 = scmp.lt.s32.totalorder %s28, 1
          %s378 = scalar_select %p377, %s28, 1
          %p379 = scmp.lt.s32.totalorder %s29, 0
          %s380 = scalar_select %p379, %s29, 0
          %s381 = sadd.s32 %s380, %s378
          %s382 = smul.addr %s381, 8
          %s383 = scalar_lea.vmem %s0, %s382
        $region60: #{grn_forward.1} parent=55 // pred_fallthru
          _
        // Predicated region
        $region61: #{grn_forward.1} parent=55 // pred_check
          %p384 = pneg %p81
        $region62: #{grn_forward.1} parent=55 // pred_check_branch
          %386 = sbr.rel (%p384) target = $region64
        $region63: #{grn_forward.1} parent=55 // pred_region
          %p387 = scmp.lt.s32.totalorder %s28, 1
          %s388 = scalar_select %p387, %s28, 1
          %s389 = scalar_lea.vmem %s1, %s388
        $region64: #{grn_forward.1} parent=55 // pred_fallthru
          _
      $region56: #{grn_forward.1} parent=5 // pred_fallthru
        _
      %p390 = scmp.le.s32.totalorder 1, %s21
      %p391 = scmp.lt.s32.totalorder %s21, 3
      %p392 = pnand %p390, %p391
      %p393 = pneg %p392
      // Predicated region
      $region65: #{grn_forward.1} parent=5 // pred_check
        _
      $region66: #{grn_forward.1} parent=5 // pred_check_branch
        %395 = sbr.rel (%p392) target = $region68
      $region67: #{grn_forward.1} parent=5 // pred_region
        %s396 = ssub.s32 %s21, 1
        %p397 = scmp.lt.s32.totalorder %s30, 1
        %s398 = scalar_select %p397, %s30, 1
        %p399 = scmp.lt.s32.totalorder %s31, 0
        %s400 = scalar_select %p399, %s31, 0
        %s401 = sadd.s32 %s400, %s398
        %s402 = smul.addr %s401, 8
        %s403 = scalar_lea.vmem %s0, %s402
        %p404 = pneg %p61
        %p405 = pneg %p58
        %p406 = scmp.lt.s32.totalorder %s30, 1
        %s407 = scalar_select %p406, %s30, 1
        %s408 = scalar_lea.vmem %s1, %s407
        %p409 = pneg %p87
        %p410 = pneg %p84
        %p411 = pneg %p108
        %p412 = pneg %p105
        %p413 = pneg %p129
        %p414 = pneg %p126
        %p415 = pneg %p150
        %p416 = pneg %p147
        %p417 = pneg %p171
        %p418 = pneg %p168
        %p419 = pneg %p192
        %p420 = pneg %p189
        %p421 = pneg %p213
        %p422 = pneg %p210
        %p423 = pneg %p234
        %p424 = pneg %p231
        %p425 = pneg %p255
        %p426 = pneg %p252
        %p427 = pneg %p276
        %p428 = pneg %p273
        %p429 = pneg %p297
        %p430 = pneg %p294
        %p431 = pneg %p325
        %p432 = pneg %p322
        %s433 = sand.u32 %s312, 1
        %s434 = scalar_lea.sflag [#allocation3], %s433
        %s435 = sand.u32 %s312, 1
        %s436 = smul.addr %s435, 8
        %s437 = scalar_lea.vmem [#allocation2], %s436
        %p438 = scmp.lt.s32.totalorder %s30, 1
        %s439 = scalar_select %p438, %s30, 1
        %p440 = scmp.lt.s32.totalorder %s31, 0
        %s441 = scalar_select %p440, %s31, 0
        %s442 = sadd.s32 %s441, %s439
        %s443 = smul.addr %s442, 8
        %s444 = scalar_lea.vmem %s0, %s443
        %p445 = scmp.lt.s32.totalorder %s30, 1
        %s446 = scalar_select %p445, %s30, 1
        %s447 = scalar_lea.vmem %s1, %s446
        %v448 = vld [vmem:[%s444] sm:$0xff]
        %v449 = vld [vmem:[%s2] sm:$0xff]
        %v450 = vld [vmem:[%s2 + $0x8] sm:$0xff]
        %v451 = vld [vmem:[%s3] sm:$0x1]
        %v453 = vlaneseq
        %v454 = vshrl.u32 %v453, 7
        %v455 = vsub.s32 0, %v454
        %v456 = vrot.slane %v451, %v455
        %vm458 = vcmask 130048
        %v460 = vsel %vm458, %v448, 0
        %462 = vmatprep.subr.mxu0 0.0
        %463 = vmatpush1.msra.mxu0 0.0
        %464 = vmatprep.subr.mxu0 0.0
        %465 = vmatpush1.msra.mxu0 0.0
        %466 = vmatprep.subr.mxu0 0.0
        %467 = vmatpush1.msra.mxu0 0.0
        %468 = vmatprep.subr.mxu0 0.0
        %469 = vmatpush1.msra.mxu0 0.0
        %470 = vmatprep.subr.mxu0 0.0
        %471 = vmatpush1.msra.mxu0 0.0
        %472 = vmatprep.subr.mxu0 0.0
        %473 = vmatpush1.msra.mxu0 0.0
        %474 = vmatprep.subr.mxu0 0.0
        %475 = vmatpush1.msra.mxu0 0.0
        %476 = vmatprep.subr.mxu0 0.0
        %477 = vmatpush1.msra.mxu0 0.0
        %478 = vmatprep.subr.mxu0 0.0
        %479 = vmatpush1.msra.mxu0 0.0
        %480 = vmatprep.subr.mxu0 0.0
        %481 = vmatpush1.msra.mxu0 0.0
        %482 = vmatprep.subr.mxu0 0.0
        %483 = vmatpush1.msra.mxu0 0.0
        %484 = vmatprep.subr.mxu0 0.0
        %485 = vmatpush1.msra.mxu0 0.0
        %486 = vmatprep.subr.mxu0 0.0
        %487 = vmatpush1.msra.mxu0 0.0
        %488 = vmatprep.subr.mxu0 0.0
        %489 = vmatpush1.msra.mxu0 0.0
        %490 = vmatprep.subr.mxu0 0.0
        %491 = vmatpush1.msra.mxu0 %v450
        %492 = vmatprep.subr.mxu0 0.0
        %493 = vmatpush1.msra.mxu0 %v449
        %494 = vmatprep.subr.mxu0 0.0
        %495 = vmatpush2.msra.mxu0 0.0
        %496 = vmatprep.subr.mxu0 0.0
        %497 = vmatpush2.msra.mxu0 0.0
        %498 = vmatprep.subr.mxu0 0.0
        %499 = vmatpush2.msra.mxu0 0.0
        %500 = vmatprep.subr.mxu0 0.0
        %501 = vmatpush2.msra.mxu0 0.0
        %502 = vmatprep.subr.mxu0 0.0
        %503 = vmatpush2.msra.mxu0 0.0
        %504 = vmatprep.subr.mxu0 0.0
        %505 = vmatpush2.msra.mxu0 0.0
        %506 = vmatprep.subr.mxu0 0.0
        %507 = vmatpush2.msra.mxu0 0.0
        %508 = vmatprep.subr.mxu0 0.0
        %509 = vmatpush2.msra.mxu0 0.0
        %510 = vmatprep.subr.mxu0 0.0
        %511 = vmatpush2.msra.mxu0 0.0
        %512 = vmatprep.subr.mxu0 0.0
        %513 = vmatpush2.msra.mxu0 0.0
        %514 = vmatprep.subr.mxu0 0.0
        %515 = vmatpush2.msra.mxu0 0.0
        %516 = vmatprep.subr.mxu0 0.0
        %517 = vmatpush2.msra.mxu0 0.0
        %518 = vmatprep.subr.mxu0 0.0
        %519 = vmatpush2.msra.mxu0 0.0
        %520 = vmatprep.subr.mxu0 0.0
        %521 = vmatpush2.msra.mxu0 0.0
        %522 = vmatprep.subr.mxu0 0.0
        %523 = vmatpush2.msra.mxu0 0.0
        %524 = vmatprep.subr.mxu0 0.0
        %525 = vmatpush2.msra.mxu0 0.0
        %526 = vmatprep.mubr.f32.mxu0 0.0
        %527 = vmatmul.mubr.f32.gmra.mxu0 %v460
        %v528 = vpop.f32.mrf.mxu0
        %v529 = vadd.f32 %v456, %v528
        %v530 = vpop.f32.mrf.mxu0
        %531 = vdwg.mxu0
        %v532 = vld [vmem:[%s447] sm:$0x1]
        %v534 = vlaneseq
        %v535 = vshrl.u32 %v534, 7
        %v536 = vsub.s32 0, %v535
        %v537 = vrot.slane %v532, %v536
        %v539 = vadd.f32 %v529, %v537
        %vm540 = vcmp.gt.f32.partialorder %v539, 0.0
        %v541 = vmin.f32 %v539, 0.0
        %v542 = vmul.f32 %v541, 1.442695
        %v543 = vpow.pop %v542
        %v544 = vsub.f32 %v543, 1.0
        %v545 = vsel %vm540, %v539, %v544
        %v546 = vld [vmem:[%s4] sm:$0xff]
        %v547 = vld [vmem:[%s4 + $0x8] sm:$0xff]
        %v548 = vld [vmem:[%s4 + $0x10] sm:$0xff]
        %v549 = vld [vmem:[%s4 + $0x18] sm:$0xff]
        %v550 = vld [vmem:[%s4 + $0x20] sm:$0xff]
        %v551 = vld [vmem:[%s4 + $0x28] sm:$0xff]
        %v552 = vld [vmem:[%s4 + $0x30] sm:$0xff]
        %v553 = vld [vmem:[%s4 + $0x38] sm:$0xff]
        %v554 = vld [vmem:[%s4 + $0x40] sm:$0xff]
        %v555 = vld [vmem:[%s4 + $0x48] sm:$0xff]
        %v556 = vld [vmem:[%s4 + $0x50] sm:$0xff]
        %v557 = vld [vmem:[%s4 + $0x58] sm:$0xff]
        %v558 = vld [vmem:[%s4 + $0x60] sm:$0xff]
        %v559 = vld [vmem:[%s4 + $0x68] sm:$0xff]
        %v560 = vld [vmem:[%s4 + $0x70] sm:$0xff]
        %v561 = vld [vmem:[%s4 + $0x78] sm:$0xff]
        %v562 = vld [vmem:[%s5] sm:$0x1]
        %v564 = vlaneseq
        %v565 = vshrl.u32 %v564, 7
        %v566 = vsub.s32 0, %v565
        %v567 = vrot.slane %v562, %v566
        %569 = vmatprep.subr.mxu0 0.0
        %570 = vmatpush1.msra.mxu0 %v561
        %571 = vmatprep.subr.mxu0 0.0
        %572 = vmatpush1.msra.mxu0 %v560
        %573 = vmatprep.subr.mxu0 0.0
        %574 = vmatpush1.msra.mxu0 %v559
        %575 = vmatprep.subr.mxu0 0.0
        %576 = vmatpush1.msra.mxu0 %v558
        %577 = vmatprep.subr.mxu0 0.0
        %578 = vmatpush1.msra.mxu0 %v557
        %579 = vmatprep.subr.mxu0 0.0
        %580 = vmatpush1.msra.mxu0 %v556
        %581 = vmatprep.subr.mxu0 0.0
        %582 = vmatpush1.msra.mxu0 %v555
        %583 = vmatprep.subr.mxu0 0.0
        %584 = vmatpush1.msra.mxu0 %v554
        %585 = vmatprep.subr.mxu0 0.0
        %586 = vmatpush1.msra.mxu0 %v553
        %587 = vmatprep.subr.mxu0 0.0
        %588 = vmatpush1.msra.mxu0 %v552
        %589 = vmatprep.subr.mxu0 0.0
        %590 = vmatpush1.msra.mxu0 %v551
        %591 = vmatprep.subr.mxu0 0.0
        %592 = vmatpush1.msra.mxu0 %v550
        %593 = vmatprep.subr.mxu0 0.0
        %594 = vmatpush1.msra.mxu0 %v549
        %595 = vmatprep.subr.mxu0 0.0
        %596 = vmatpush1.msra.mxu0 %v548
        %597 = vmatprep.subr.mxu0 0.0
        %598 = vmatpush1.msra.mxu0 %v547
        %599 = vmatprep.subr.mxu0 0.0
        %600 = vmatpush1.msra.mxu0 %v546
        %601 = vmatprep.subr.mxu0 0.0
        %602 = vmatpush2.msra.mxu0 0.0
        %603 = vmatprep.subr.mxu0 0.0
        %604 = vmatpush2.msra.mxu0 0.0
        %605 = vmatprep.subr.mxu0 0.0
        %606 = vmatpush2.msra.mxu0 0.0
        %607 = vmatprep.subr.mxu0 0.0
        %608 = vmatpush2.msra.mxu0 0.0
        %609 = vmatprep.subr.mxu0 0.0
        %610 = vmatpush2.msra.mxu0 0.0
        %611 = vmatprep.subr.mxu0 0.0
        %612 = vmatpush2.msra.mxu0 0.0
        %613 = vmatprep.subr.mxu0 0.0
        %614 = vmatpush2.msra.mxu0 0.0
        %615 = vmatprep.subr.mxu0 0.0
        %616 = vmatpush2.msra.mxu0 0.0
        %617 = vmatprep.subr.mxu0 0.0
        %618 = vmatpush2.msra.mxu0 0.0
        %619 = vmatprep.subr.mxu0 0.0
        %620 = vmatpush2.msra.mxu0 0.0
        %621 = vmatprep.subr.mxu0 0.0
        %622 = vmatpush2.msra.mxu0 0.0
        %623 = vmatprep.subr.mxu0 0.0
        %624 = vmatpush2.msra.mxu0 0.0
        %625 = vmatprep.subr.mxu0 0.0
        %626 = vmatpush2.msra.mxu0 0.0
        %627 = vmatprep.subr.mxu0 0.0
        %628 = vmatpush2.msra.mxu0 0.0
        %629 = vmatprep.subr.mxu0 0.0
        %630 = vmatpush2.msra.mxu0 0.0
        %631 = vmatprep.subr.mxu0 0.0
        %632 = vmatpush2.msra.mxu0 0.0
        %633 = vmatprep.mubr.f32.mxu0 0.0
        %634 = vmatmul.mubr.f32.gmra.mxu0 %v545
        %v635 = vpop.f32.mrf.mxu0
        %v636 = vadd.f32 %v567, %v635
        %v637 = vpop.f32.mrf.mxu0
        %638 = vdwg.mxu0
        %v639 = vld [vmem:[%s6] sm:$0xff]
        %v640 = vld [vmem:[%s6 + $0x8] sm:$0xff]
        %v641 = vld [vmem:[%s6 + $0x10] sm:$0xff]
        %v642 = vld [vmem:[%s6 + $0x18] sm:$0xff]
        %v643 = vld [vmem:[%s6 + $0x20] sm:$0xff]
        %v644 = vld [vmem:[%s6 + $0x28] sm:$0xff]
        %v645 = vld [vmem:[%s6 + $0x30] sm:$0xff]
        %v646 = vld [vmem:[%s6 + $0x38] sm:$0xff]
        %v647 = vld [vmem:[%s6 + $0x40] sm:$0xff]
        %v648 = vld [vmem:[%s6 + $0x48] sm:$0xff]
        %v649 = vld [vmem:[%s6 + $0x50] sm:$0xff]
        %v650 = vld [vmem:[%s6 + $0x58] sm:$0xff]
        %v651 = vld [vmem:[%s6 + $0x60] sm:$0xff]
        %v652 = vld [vmem:[%s6 + $0x68] sm:$0xff]
        %v653 = vld [vmem:[%s6 + $0x70] sm:$0xff]
        %v654 = vld [vmem:[%s6 + $0x78] sm:$0xff]
        %v655 = vld [vmem:[%s7] sm:$0x1]
        %v657 = vlaneseq
        %v658 = vshrl.u32 %v657, 7
        %v659 = vsub.s32 0, %v658
        %v660 = vrot.slane %v655, %v659
        %662 = vmatprep.subr.mxu0 0.0
        %663 = vmatpush1.msra.mxu0 %v654
        %664 = vmatprep.subr.mxu0 0.0
        %665 = vmatpush1.msra.mxu0 %v653
        %666 = vmatprep.subr.mxu0 0.0
        %667 = vmatpush1.msra.mxu0 %v652
        %668 = vmatprep.subr.mxu0 0.0
        %669 = vmatpush1.msra.mxu0 %v651
        %670 = vmatprep.subr.mxu0 0.0
        %671 = vmatpush1.msra.mxu0 %v650
        %672 = vmatprep.subr.mxu0 0.0
        %673 = vmatpush1.msra.mxu0 %v649
        %674 = vmatprep.subr.mxu0 0.0
        %675 = vmatpush1.msra.mxu0 %v648
        %676 = vmatprep.subr.mxu0 0.0
        %677 = vmatpush1.msra.mxu0 %v647
        %678 = vmatprep.subr.mxu0 0.0
        %679 = vmatpush1.msra.mxu0 %v646
        %680 = vmatprep.subr.mxu0 0.0
        %681 = vmatpush1.msra.mxu0 %v645
        %682 = vmatprep.subr.mxu0 0.0
        %683 = vmatpush1.msra.mxu0 %v644
        %684 = vmatprep.subr.mxu0 0.0
        %685 = vmatpush1.msra.mxu0 %v643
        %686 = vmatprep.subr.mxu0 0.0
        %687 = vmatpush1.msra.mxu0 %v642
        %688 = vmatprep.subr.mxu0 0.0
        %689 = vmatpush1.msra.mxu0 %v641
        %690 = vmatprep.subr.mxu0 0.0
        %691 = vmatpush1.msra.mxu0 %v640
        %692 = vmatprep.subr.mxu0 0.0
        %693 = vmatpush1.msra.mxu0 %v639
        %694 = vmatprep.subr.mxu0 0.0
        %695 = vmatpush2.msra.mxu0 0.0
        %696 = vmatprep.subr.mxu0 0.0
        %697 = vmatpush2.msra.mxu0 0.0
        %698 = vmatprep.subr.mxu0 0.0
        %699 = vmatpush2.msra.mxu0 0.0
        %700 = vmatprep.subr.mxu0 0.0
        %701 = vmatpush2.msra.mxu0 0.0
        %702 = vmatprep.subr.mxu0 0.0
        %703 = vmatpush2.msra.mxu0 0.0
        %704 = vmatprep.subr.mxu0 0.0
        %705 = vmatpush2.msra.mxu0 0.0
        %706 = vmatprep.subr.mxu0 0.0
        %707 = vmatpush2.msra.mxu0 0.0
        %708 = vmatprep.subr.mxu0 0.0
        %709 = vmatpush2.msra.mxu0 0.0
        %710 = vmatprep.subr.mxu0 0.0
        %711 = vmatpush2.msra.mxu0 0.0
        %712 = vmatprep.subr.mxu0 0.0
        %713 = vmatpush2.msra.mxu0 0.0
        %714 = vmatprep.subr.mxu0 0.0
        %715 = vmatpush2.msra.mxu0 0.0
        %716 = vmatprep.subr.mxu0 0.0
        %717 = vmatpush2.msra.mxu0 0.0
        %718 = vmatprep.subr.mxu0 0.0
        %719 = vmatpush2.msra.mxu0 0.0
        %720 = vmatprep.subr.mxu0 0.0
        %721 = vmatpush2.msra.mxu0 0.0
        %722 = vmatprep.subr.mxu0 0.0
        %723 = vmatpush2.msra.mxu0 0.0
        %724 = vmatprep.subr.mxu0 0.0
        %725 = vmatpush2.msra.mxu0 0.0
        %726 = vmatprep.mubr.f32.mxu0 0.0
        %727 = vmatmul.mubr.f32.gmra.mxu0 %v636
        %v728 = vpop.f32.mrf.mxu0
        %v729 = vadd.f32 %v660, %v728
        %v730 = vpop.f32.mrf.mxu0
        %731 = vdwg.mxu0
        %v732 = vld [vmem:[%s8] sm:$0xff]
        %v733 = vld [vmem:[%s8 + $0x8] sm:$0xff]
        %v734 = vld [vmem:[%s8 + $0x10] sm:$0xff]
        %v735 = vld [vmem:[%s8 + $0x18] sm:$0xff]
        %v736 = vld [vmem:[%s8 + $0x20] sm:$0xff]
        %v737 = vld [vmem:[%s8 + $0x28] sm:$0xff]
        %v738 = vld [vmem:[%s8 + $0x30] sm:$0xff]
        %v739 = vld [vmem:[%s8 + $0x38] sm:$0xff]
        %v740 = vld [vmem:[%s8 + $0x40] sm:$0xff]
        %v741 = vld [vmem:[%s8 + $0x48] sm:$0xff]
        %v742 = vld [vmem:[%s8 + $0x50] sm:$0xff]
        %v743 = vld [vmem:[%s8 + $0x58] sm:$0xff]
        %v744 = vld [vmem:[%s8 + $0x60] sm:$0xff]
        %v745 = vld [vmem:[%s8 + $0x68] sm:$0xff]
        %v746 = vld [vmem:[%s8 + $0x70] sm:$0xff]
        %v747 = vld [vmem:[%s8 + $0x78] sm:$0xff]
        %v748 = vld [vmem:[%s9] sm:$0x1]
        %v750 = vlaneseq
        %v751 = vshrl.u32 %v750, 7
        %v752 = vsub.s32 0, %v751
        %v753 = vrot.slane %v748, %v752
        %755 = vmatprep.subr.mxu0 0.0
        %756 = vmatpush1.msra.mxu0 %v747
        %757 = vmatprep.subr.mxu0 0.0
        %758 = vmatpush1.msra.mxu0 %v746
        %759 = vmatprep.subr.mxu0 0.0
        %760 = vmatpush1.msra.mxu0 %v745
        %761 = vmatprep.subr.mxu0 0.0
        %762 = vmatpush1.msra.mxu0 %v744
        %763 = vmatprep.subr.mxu0 0.0
        %764 = vmatpush1.msra.mxu0 %v743
        %765 = vmatprep.subr.mxu0 0.0
        %766 = vmatpush1.msra.mxu0 %v742
        %767 = vmatprep.subr.mxu0 0.0
        %768 = vmatpush1.msra.mxu0 %v741
        %769 = vmatprep.subr.mxu0 0.0
        %770 = vmatpush1.msra.mxu0 %v740
        %771 = vmatprep.subr.mxu0 0.0
        %772 = vmatpush1.msra.mxu0 %v739
        %773 = vmatprep.subr.mxu0 0.0
        %774 = vmatpush1.msra.mxu0 %v738
        %775 = vmatprep.subr.mxu0 0.0
        %776 = vmatpush1.msra.mxu0 %v737
        %777 = vmatprep.subr.mxu0 0.0
        %778 = vmatpush1.msra.mxu0 %v736
        %779 = vmatprep.subr.mxu0 0.0
        %780 = vmatpush1.msra.mxu0 %v735
        %781 = vmatprep.subr.mxu0 0.0
        %782 = vmatpush1.msra.mxu0 %v734
        %783 = vmatprep.subr.mxu0 0.0
        %784 = vmatpush1.msra.mxu0 %v733
        %785 = vmatprep.subr.mxu0 0.0
        %786 = vmatpush1.msra.mxu0 %v732
        %787 = vmatprep.subr.mxu0 0.0
        %788 = vmatpush2.msra.mxu0 0.0
        %789 = vmatprep.subr.mxu0 0.0
        %790 = vmatpush2.msra.mxu0 0.0
        %791 = vmatprep.subr.mxu0 0.0
        %792 = vmatpush2.msra.mxu0 0.0
        %793 = vmatprep.subr.mxu0 0.0
        %794 = vmatpush2.msra.mxu0 0.0
        %795 = vmatprep.subr.mxu0 0.0
        %796 = vmatpush2.msra.mxu0 0.0
        %797 = vmatprep.subr.mxu0 0.0
        %798 = vmatpush2.msra.mxu0 0.0
        %799 = vmatprep.subr.mxu0 0.0
        %800 = vmatpush2.msra.mxu0 0.0
        %801 = vmatprep.subr.mxu0 0.0
        %802 = vmatpush2.msra.mxu0 0.0
        %803 = vmatprep.subr.mxu0 0.0
        %804 = vmatpush2.msra.mxu0 0.0
        %805 = vmatprep.subr.mxu0 0.0
        %806 = vmatpush2.msra.mxu0 0.0
        %807 = vmatprep.subr.mxu0 0.0
        %808 = vmatpush2.msra.mxu0 0.0
        %809 = vmatprep.subr.mxu0 0.0
        %810 = vmatpush2.msra.mxu0 0.0
        %811 = vmatprep.subr.mxu0 0.0
        %812 = vmatpush2.msra.mxu0 0.0
        %813 = vmatprep.subr.mxu0 0.0
        %814 = vmatpush2.msra.mxu0 0.0
        %815 = vmatprep.subr.mxu0 0.0
        %816 = vmatpush2.msra.mxu0 0.0
        %817 = vmatprep.subr.mxu0 0.0
        %818 = vmatpush2.msra.mxu0 0.0
        %819 = vmatprep.mubr.f32.mxu0 0.0
        %820 = vmatmul.mubr.f32.gmra.mxu0 %v636
        %v821 = vpop.f32.mrf.mxu0
        %v822 = vadd.f32 %v753, %v821
        %v823 = vpop.f32.mrf.mxu0
        %824 = vdwg.mxu0
        %v825 = vxor.u32 %v822, 2147483648
        %v826 = vmul.f32 %v825, 1.442695
        %v827 = vpow.pop %v826
        %v828 = vadd.f32 %v827, 1.0
        %v829 = vrcp.pop %v828
        %v830 = vmul.f32 1.0, %v829
        %v831 = vmul.f32 %v729, %v830
        %v832 = vadd.f32 %v831, %v529
        %v833 = vlaneseq
        %v834 = vand.u32 %v833, 127
        %vm835 = vcmp.lt.s32.totalorder %v834, 32
        %836 = vadd.xlane.f32.xlu0 %v832
        %v837 = vpop.xlane.xlu0 %836
        %v838 = vmul.f32 %v837, 0.03125
        %v839 = vsub.f32 %v832, %v838
        %v840 = vsel %vm835, 1, 0
        %vm841 = vcmp.eq.s32.totalorder %v840, 1
        %v842 = vsel %vm841, %v839, 0.0
        %v843 = vmul.f32 %v842, %v842
        %844 = vadd.xlane.f32.xlu0 %v843
        %v845 = vpop.xlane.xlu0 %844
        %v846 = vmul.f32 %v845, 0.03125
        %v847 = vadd.f32 %v846, 1e-05
        %v848 = vrsqrt.pop %v847
        %v849 = vmul.f32 %v842, %v848
        %v850 = vld [vmem:[%s10] sm:$0x1]
        %v852 = vlaneseq
        %v853 = vshrl.u32 %v852, 7
        %v854 = vsub.s32 0, %v853
        %v855 = vrot.slane %v850, %v854
        %v857 = vmul.f32 %v849, %v855
        %v858 = vld [vmem:[%s11] sm:$0x1]
        %v860 = vlaneseq
        %v861 = vshrl.u32 %v860, 7
        %v862 = vsub.s32 0, %v861
        %v863 = vrot.slane %v858, %v862
        %v865 = vadd.f32 %v857, %v863
        %866 = vst [vmem:[%s437] sm:$0xff] %v865
        %s867 = sand.u32 %s312, 1
        %s868 = scalar_lea.sflag [#allocation3], %s867
        %s869 = sand.u32 %s312, 1
        %s870 = smul.addr %s869, 8
        %s871 = scalar_lea.vmem [#allocation2], %s870
        // Predicated region
        $region69: #{grn_forward.1} parent=67 // pred_check
          %p872 = pneg %p322
        $region70: #{grn_forward.1} parent=67 // pred_check_branch
          %874 = sbr.rel (%p872) target = $region72
        $region71: #{grn_forward.1} parent=67 // pred_region
          %s876 = ssub.s32 128, 128
          %877 = vsyncadd %s868, %s876
          %s878 = sadd.s32 %s31, %s30
          %s879 = smul.addr %s878, 128
          %s880 = scalar_lea.hbm %s12, %s879
          %s882 = sshll.u32 %s871, 4
          %s883 = int_to_ptr.vmem [resolvable:$true] %s882
          %885 = dma.vmem_to_hbm [thread:$0]  %s883, 128, %s880, %s868
        $region72: #{grn_forward.1} parent=67 // pred_fallthru
          _
      $region68: #{grn_forward.1} parent=5 // pred_fallthru
        _
      %p886 = scmp.le.s32.totalorder 2, %s21
      // Predicated region
      $region73: #{grn_forward.1} parent=5 // pred_check
        %p887 = pneg %p886
      $region74: #{grn_forward.1} parent=5 // pred_check_branch
        %889 = sbr.rel (%p887) target = $region76
      $region75: #{grn_forward.1} parent=5 // pred_region
        %s890 = ssub.s32 %s21, 2
        // Predicated region
        $region77: #{grn_forward.1} parent=75 // pred_check
          %p891 = pneg %p328
        $region78: #{grn_forward.1} parent=75 // pred_check_branch
          %893 = sbr.rel (%p891) target = $region80
        $region79: #{grn_forward.1} parent=75 // pred_region
          %s894 = sand.u32 %s313, 1
          %s895 = scalar_lea.sflag [#allocation3], %s894
          %s896 = sand.u32 %s313, 1
          %s897 = smul.addr %s896, 8
          %s898 = scalar_lea.vmem [#allocation2], %s897
          %899 = dma.done %s895, 128
        $region80: #{grn_forward.1} parent=75 // pred_fallthru
          _
      $region76: #{grn_forward.1} parent=5 // pred_fallthru
        _
    $region6: #{grn_forward.1} parent=1 // loop_footer
      %s25 = sadd.s32 1, %s21
    $region7: #{grn_forward.1} parent=1 // loop_footer_branch
      %20 = sbr.rel target = $region3
    $region8: #{grn_forward.1} parent=1 // loop_exit
      _
    %900 = vsyncpa [#allocation3], 1
    %s901 = scalar_lea.sflag [#allocation3], 1
    %902 = vsyncpa %s901, 1

</llo_original>
